<compile_context>
chip_gen: v7x
topology: tpu7x:2x2x1
jax: 0.10.0
libtpu: 0.0.40
codegen_flags: <defaults>
</compile_context>

<pallas_src>
import functools

import jax
import jax.numpy as jnp
import numpy as np
from jax import lax
from jax.experimental import pallas as pl
from jax.experimental.pallas import tpu as pltpu

_LANE = 128
# Set False if an exact divide is preferred over the EUP approximate reciprocal.
_APPROX_RECIP = True


def _round_up(x, m):
    return ((x + m - 1) // m) * m


def _sigmoid_f32(x):
    # exp on the EUP; reciprocal on the EUP too (approx) instead of a VALU divide.
    return pl.reciprocal(1.0 + jnp.exp(-x), approx=_APPROX_RECIP)


# --------------------------------------------------------------------------- #
# Fast path: elements viewed as (B, R, 128); block (1, TR, 128).
# out_ref accumulates per-lane partials: sublane 0 = sum(t), 1 = sum(p), 2 = sum(t*p).
# --------------------------------------------------------------------------- #
def _gdl_sums_kernel_3d(logits_ref, targets_ref, out_ref, *, rows_total, block_rows):
    m = pl.program_id(1)

    @pl.when(m == 0)
    def _():
        out_ref[...] = jnp.zeros_like(out_ref)

    t = targets_ref[...].astype(jnp.float32)          # (1, TR, 128)
    x = logits_ref[...].astype(jnp.float32)
    p = _sigmoid_f32(x)

    if rows_total % block_rows != 0:
        # Ragged tail: rows past rows_total in the last block hold garbage — mask them.
        row = m * block_rows + lax.broadcasted_iota(jnp.int32, t.shape, 1)
        valid = row < rows_total
        t = jnp.where(valid, t, 0.0)
        p = jnp.where(valid, p, 0.0)

    # Fold only the row axis per step (cheap cross-vreg adds); keep 128 lane partials.
    s_t = jnp.sum(t, axis=1, keepdims=True)           # (1, 1, 128)
    s_p = jnp.sum(p, axis=1, keepdims=True)
    s_tp = jnp.sum(t * p, axis=1, keepdims=True)

    srow = lax.broadcasted_iota(jnp.int32, out_ref.shape, 1)   # (1, 3, 128)
    partial = (jnp.where(srow == 0, s_t, 0.0)
               + jnp.where(srow == 1, s_p, 0.0)
               + jnp.where(srow == 2, s_tp, 0.0))
    out_ref[...] += partial


# --------------------------------------------------------------------------- #
# Fallback path (M % 128 != 0): 2D (B, M) with lane-dense (B, TM) blocks.
# out_ref lanes: 0 = sum(t), 1 = sum(p), 2 = sum(t*p).
# --------------------------------------------------------------------------- #
def _gdl_sums_kernel_2d(logits_ref, targets_ref, out_ref, *, m_total, block_m):
    m = pl.program_id(0)

    @pl.when(m == 0)
    def _():
        out_ref[...] = jnp.zeros_like(out_ref)

    t = targets_ref[...].astype(jnp.float32)          # (B, TM)
    x = logits_ref[...].astype(jnp.float32)
    p = _sigmoid_f32(x)

    if m_total % block_m != 0:
        col = m * block_m + lax.broadcasted_iota(jnp.int32, t.shape, 1)
        valid = col < m_total
        t = jnp.where(valid, t, 0.0)
        p = jnp.where(valid, p, 0.0)

    s_t = jnp.sum(t, axis=-1, keepdims=True)          # (B, 1)
    s_p = jnp.sum(p, axis=-1, keepdims=True)
    s_tp = jnp.sum(t * p, axis=-1, keepdims=True)

    lane = lax.broadcasted_iota(jnp.int32, out_ref.shape, 1)   # (B, 128)
    partial = (jnp.where(lane == 0, s_t, 0.0)
               + jnp.where(lane == 1, s_p, 0.0)
               + jnp.where(lane == 2, s_tp, 0.0))
    out_ref[...] += partial


@functools.partial(jax.jit, static_argnames=("target_block_bytes",))
def gen_d_loss(inputs, targets, *, target_block_bytes=1 << 20):
    """GenDLoss.forward with the default (empty) loss_mask / mito_mask."""
    # TODO(synk): loss_mask / mito_mask branches are not implemented (defaults are []).
    # TODO(synk): torch.nansum's NaN-skipping inside the per-class reductions is not
    #             replicated (only the final per-batch nanmean handles NaN).
    B = inputs.shape[0]
    logits = jnp.reshape(inputs, (B, -1))             # native dtype, no extra HBM copy
    tgt = jnp.reshape(targets, (B, -1))
    M = logits.shape[1]

    it_l = jnp.dtype(logits.dtype).itemsize
    it_t = jnp.dtype(tgt.dtype).itemsize
    it_max = max(it_l, it_t)
    # Sublane multiple honoring sub-32-bit packing of the narrowest streamed dtype.
    sub = 8 * max(1, 4 // min(it_l, it_t))            # 8 f32, 16 bf16, 32 int8/bool

    if M % _LANE == 0:
        # ---------------- fast path: (B, R, 128) full-vreg tiling ----------------
        R = M // _LANE
        # ~1 MiB per input block (x2 inputs x2 pipeline buffers ~ 4 MiB of VMEM,
        # safely under the 16 MiB v5e / 32 MiB v6e-v7x scoped defaults).
        tr_target = max(sub, (target_block_bytes // (_LANE * it_max)) // sub * sub)
        if R <= tr_target:
            tr, n_m = R, 1                            # single block: full dim always legal
        else:
            tr, n_m = tr_target, pl.cdiv(R, tr_target)

        logits3 = logits.reshape(B, R, _LANE)
        tgt3 = tgt.reshape(B, R, _LANE)
        kernel = functools.partial(_gdl_sums_kernel_3d, rows_total=R, block_rows=tr)

        sums = pl.pallas_call(
            kernel,
            out_shape=jax.ShapeDtypeStruct((B, 3, _LANE), jnp.float32),
            grid=(B, n_m),
            in_specs=[
                pl.BlockSpec((1, tr, _LANE), lambda b, m: (b, m, 0)),
                pl.BlockSpec((1, tr, _LANE), lambda b, m: (b, m, 0)),
            ],
            out_specs=pl.BlockSpec((1, 3, _LANE), lambda b, m: (b, 0, 0)),
            compiler_params=pltpu.CompilerParams(
                dimension_semantics=("parallel", "arbitrary")),
        )(logits3, tgt3)

        s_t = jnp.sum(sums[:, 0, :], axis=-1)
        s_p = jnp.sum(sums[:, 1, :], axis=-1)
        s_tp = jnp.sum(sums[:, 2, :], axis=-1)
    else:
        # ---------------- fallback: 2D lane-dense blocks, in-kernel tail mask ----
        tm_target = max(_LANE,
                        (target_block_bytes // (max(B, 1) * it_max)) // _LANE * _LANE)
        if M <= tm_target:
            tm, n_m = M, 1                            # single block spans the full axis
        else:
            tm, n_m = tm_target, pl.cdiv(M, tm_target)

        kernel = functools.partial(_gdl_sums_kernel_2d, m_total=M, block_m=tm)
        sums = pl.pallas_call(
            kernel,
            out_shape=jax.ShapeDtypeStruct((B, _LANE), jnp.float32),
            grid=(n_m,),
            in_specs=[
                pl.BlockSpec((B, tm), lambda m: (0, m)),
                pl.BlockSpec((B, tm), lambda m: (0, m)),
            ],
            out_specs=pl.BlockSpec((B, _LANE), lambda m: (0, 0)),
            compiler_params=pltpu.CompilerParams(
                dimension_semantics=("arbitrary",)),
        )(logits, tgt)
        s_t, s_p, s_tp = sums[:, 0], sums[:, 1], sums[:, 2]

    # Closed-form generalized Dice over the 2 stacked classes: (t, p) and (1-t, 1-p).
    m_f = jnp.float32(M)
    inter0 = s_tp
    inter1 = m_f - s_t - s_p + s_tp
    union0 = s_t + s_p
    union1 = 2.0 * m_f - s_t - s_p
    w0 = 1.0 / (s_t ** 2 + 1e-6)
    w1 = 1.0 / ((m_f - s_t) ** 2 + 1e-6)
    numer = w0 * inter0 + w1 * inter1
    denom = w0 * union0 + w1 * union1
    loss_b = 1.0 - 2.0 * numer / denom                 # (B,)
    return jnp.nanmean(loss_b)


def reference_gen_d_loss(inputs, targets):
    """Literal JAX transcription of the torch GenDLoss.forward (no masks)."""
    B = inputs.shape[0]
    p = jax.nn.sigmoid(inputs.astype(jnp.float32)).reshape(B, -1)
    t = targets.astype(jnp.float32).reshape(B, -1)
    pp = jnp.stack([p, 1.0 - p], axis=-1)              # (B, M, 2)
    tt = jnp.stack([t, 1.0 - t], axis=-1)
    tt = jnp.transpose(tt, (0, 2, 1))                  # (B, 2, M)
    pp = jnp.transpose(pp, (0, 2, 1))
    weights = 1.0 / (jnp.sum(tt, axis=-1) ** 2 + 1e-6)  # (B, 2)
    numer = jnp.nansum(weights * jnp.nansum(tt * pp, axis=-1), axis=-1)
    denom = jnp.nansum(weights * jnp.nansum(tt + pp, axis=-1), axis=-1)
    return jnp.nanmean(1.0 - 2.0 * numer / denom)


if __name__ == "__main__":
    B, C, H, W = 2, 4, 16, 16
    key = jax.random.PRNGKey(0)
    k1, k2 = jax.random.split(key)
    inputs = jax.random.normal(k1, (B, C, H, W), jnp.float32)                 # logits
    targets = jax.random.bernoulli(k2, 0.35, (B, C, H, W)).astype(jnp.float32)

    loss = jax.block_until_ready(gen_d_loss(inputs, targets))

    ref = jax.block_until_ready(reference_gen_d_loss(inputs, targets))
    np.testing.assert_allclose(np.asarray(loss), np.asarray(ref),
                               rtol=5e-4, atol=5e-4)
    print("KERNEL_OK")
</pallas_src>

<mosaic_0001>
module attributes {stable_mosaic.version = 11 : i64} {
  func.func @_gdl_sums_kernel_3d(%arg0: i32, %arg1: i32, %arg2: memref<1x8x128xf32, #tpu.memory_space<vmem>>, %arg3: memref<1x8x128xf32, #tpu.memory_space<vmem>>, %arg4: memref<1x3x128xf32, #tpu.memory_space<vmem>>) attributes {dimension_semantics = [#tpu.dimension_semantics<parallel>, #tpu.dimension_semantics<arbitrary>], iteration_bounds = array<i64: 2, 1>, scalar_prefetch = 0 : i64, scratch_operands = 0 : i64, tpu.core_type = #tpu.core_type<tc>, window_params = [{transform_indices = @transform_0, window_bounds = array<i64: 1, 8, 128>}, {transform_indices = @transform_1, window_bounds = array<i64: 1, 8, 128>}, {transform_indices = @transform_2, window_bounds = array<i64: 1, 3, 128>}]} {
    %c0_i32 = arith.constant 0 : i32
    %0 = arith.cmpi eq, %arg1, %c0_i32 : i32
    %1 = arith.extui %0 : i1 to i32
    %c0_i32_0 = arith.constant 0 : i32
    %2 = arith.cmpi ne, %1, %c0_i32_0 : i32
    scf.if %2 {
      %cst_20 = arith.constant 0.000000e+00 : f32
      %42 = vector.broadcast %cst_20 : f32 to vector<1x3x128xf32>
      %c0_21 = arith.constant 0 : index
      %c0_22 = arith.constant 0 : index
      %c0_23 = arith.constant 0 : index
      %43 = vector.load %arg4[%c0_21, %c0_22, %c0_23] : memref<1x3x128xf32, #tpu.memory_space<vmem>>, vector<1x3x128xf32>
      tpu.vector_store %arg4[%c0_21, %c0_22, %c0_23], %42 {strides = array<i32>} : memref<1x3x128xf32, #tpu.memory_space<vmem>>, vector<1x3x128xf32>,
    } else {
    }
    %c0 = arith.constant 0 : index
    %c0_1 = arith.constant 0 : index
    %c0_2 = arith.constant 0 : index
    %3 = vector.load %arg3[%c0, %c0_1, %c0_2] : memref<1x8x128xf32, #tpu.memory_space<vmem>>, vector<1x8x128xf32>
    %c0_3 = arith.constant 0 : index
    %c0_4 = arith.constant 0 : index
    %c0_5 = arith.constant 0 : index
    %4 = vector.load %arg2[%c0_3, %c0_4, %c0_5] : memref<1x8x128xf32, #tpu.memory_space<vmem>>, vector<1x8x128xf32>
    %cst = arith.constant 0.000000e+00 : f32
    %5 = vector.broadcast %cst : f32 to vector<1x8x128xf32>
    %6 = arith.subf %5, %4 : vector<1x8x128xf32>
    %7 = math.exp %6 : vector<1x8x128xf32>
    %cst_6 = arith.constant 1.000000e+00 : f32
    %8 = vector.broadcast %cst_6 : f32 to vector<1x8x128xf32>
    %9 = arith.addf %8, %7 : vector<1x8x128xf32>
    %10 = tpu.reciprocal %9 {approx = true} : vector<1x8x128xf32> -> vector<1x8x128xf32>
    %cst_7 = arith.constant dense<0.000000e+00> : vector<1x128xf32>
    %11 = vector.multi_reduction <add>, %3, %cst_7 [1] : vector<1x8x128xf32> to vector<1x128xf32>
    %12 = vector.shape_cast %11 : vector<1x128xf32> to vector<1x1x128xf32>
    %cst_8 = arith.constant dense<0.000000e+00> : vector<1x128xf32>
    %13 = vector.multi_reduction <add>, %10, %cst_8 [1] : vector<1x8x128xf32> to vector<1x128xf32>
    %14 = vector.shape_cast %13 : vector<1x128xf32> to vector<1x1x128xf32>
    %15 = arith.mulf %3, %10 : vector<1x8x128xf32>
    %cst_9 = arith.constant dense<0.000000e+00> : vector<1x128xf32>
    %16 = vector.multi_reduction <add>, %15, %cst_9 [1] : vector<1x8x128xf32> to vector<1x128xf32>
    %17 = vector.shape_cast %16 : vector<1x128xf32> to vector<1x1x128xf32>
    %18 = tpu.iota {dimensions = array<i32: 1>} : vector<1x3x128xi32>
    %c0_i32_10 = arith.constant 0 : i32
    %19 = vector.broadcast %c0_i32_10 : i32 to vector<1x3x128xi32>
    %20 = arith.cmpi eq, %18, %19 : vector<1x3x128xi32>
    %cst_11 = arith.constant 0.000000e+00 : f32
    %21 = vector.shape_cast %12 : vector<1x1x128xf32> to vector<1x1x128xf32>
    %22 = vector.broadcast %21 : vector<1x1x128xf32> to vector<1x3x128xf32>
    %23 = vector.broadcast %cst_11 : f32 to vector<1x3x128xf32>
    %24 = arith.select %20, %22, %23 : vector<1x3x128xi1>, vector<1x3x128xf32>
    %c1_i32 = arith.constant 1 : i32
    %25 = vector.broadcast %c1_i32 : i32 to vector<1x3x128xi32>
    %26 = arith.cmpi eq, %18, %25 : vector<1x3x128xi32>
    %cst_12 = arith.constant 0.000000e+00 : f32
    %27 = vector.shape_cast %14 : vector<1x1x128xf32> to vector<1x1x128xf32>
    %28 = vector.broadcast %27 : vector<1x1x128xf32> to vector<1x3x128xf32>
    %29 = vector.broadcast %cst_12 : f32 to vector<1x3x128xf32>
    %30 = arith.select %26, %28, %29 : vector<1x3x128xi1>, vector<1x3x128xf32>
    %31 = arith.addf %24, %30 : vector<1x3x128xf32>
    %c2_i32 = arith.constant 2 : i32
    %32 = vector.broadcast %c2_i32 : i32 to vector<1x3x128xi32>
    %33 = arith.cmpi eq, %18, %32 : vector<1x3x128xi32>
    %cst_13 = arith.constant 0.000000e+00 : f32
    %34 = vector.shape_cast %17 : vector<1x1x128xf32> to vector<1x1x128xf32>
    %35 = vector.broadcast %34 : vector<1x1x128xf32> to vector<1x3x128xf32>
    %36 = vector.broadcast %cst_13 : f32 to vector<1x3x128xf32>
    %37 = arith.select %33, %35, %36 : vector<1x3x128xi1>, vector<1x3x128xf32>
    %38 = arith.addf %31, %37 : vector<1x3x128xf32>
    %c0_14 = arith.constant 0 : index
    %c0_15 = arith.constant 0 : index
    %c0_16 = arith.constant 0 : index
    %39 = vector.load %arg4[%c0_14, %c0_15, %c0_16] : memref<1x3x128xf32, #tpu.memory_space<vmem>>, vector<1x3x128xf32>
    %40 = arith.addf %39, %38 : vector<1x3x128xf32>
    %c0_17 = arith.constant 0 : index
    %c0_18 = arith.constant 0 : index
    %c0_19 = arith.constant 0 : index
    %41 = vector.load %arg4[%c0_17, %c0_18, %c0_19] : memref<1x3x128xf32, #tpu.memory_space<vmem>>, vector<1x3x128xf32>
    tpu.vector_store %arg4[%c0_17, %c0_18, %c0_19], %40 {strides = array<i32>} : memref<1x3x128xf32, #tpu.memory_space<vmem>>, vector<1x3x128xf32>,
    return
  }
  func.func @transform_0(%arg0: i32, %arg1: i32) -> (i32, i32, i32) {
    %c0_i32 = arith.constant 0 : i32
    %c0_i32_0 = arith.constant 0 : i32
    return %arg0, %arg1, %c0_i32 : i32, i32, i32
  }
  func.func @transform_1(%arg0: i32, %arg1: i32) -> (i32, i32, i32) {
    %c0_i32 = arith.constant 0 : i32
    %c0_i32_0 = arith.constant 0 : i32
    return %arg0, %arg1, %c0_i32 : i32, i32, i32
  }
  func.func @transform_2(%arg0: i32, %arg1: i32) -> (i32, i32, i32) {
    %c0_i32 = arith.constant 0 : i32
    %c0_i32_0 = arith.constant 0 : i32
    %c0_i32_1 = arith.constant 0 : i32
    return %arg0, %c0_i32, %c0_i32_0 : i32, i32, i32
  }
}

</mosaic_0001>

<llo_original>
// kernel: gen_d_loss.1
$region0: #{gen_d_loss.1}
  #allocation0 [shape = 'u32[]', space=smem, size = 0x4, offset = 0x4, fixed_abs, tag = 'smem constant byte address 0x4 - core index']
  #allocation1 [shape = 'u32[144,128]{1,0:T(1,128)}', space=vmem, size = 0x12000, scoped, tag = 'internal scratch']
  %s0 = inlined_call_operand.vmem [shape: f32[2,8,128], index: 0, kind: input, shape index: {}]
  %s1 = inlined_call_operand.vmem [shape: f32[2,8,128], index: 1, kind: input, shape index: {}]
  %s2 = inlined_call_operand.vmem [shape: f32[2,3,128], index: 2, kind: output, shape index: {}]
  %s3 = sld [smem:[#allocation0]]
  $region45: #{gen_d_loss.1} parent=0
    _
  %s5 = ssub.s32 1, %s3
  %s6 = scalar_select 0, %s5, %s3
  loop: start=0, step=1, limit=4
  $region2: #{gen_d_loss.1} parent=0 // loop_pre_header
    _
  $region3: #{gen_d_loss.1} parent=0 // loop_header
    %s8 = sphi 0, %s12
    %p9 = scmp.ge.s32.totalorder %s8, 4
    %s15 = sphi 0, %s27
    %s16 = sphi 0, %s23
    %s17 = sphi 0, %s15
    %s18 = sphi 0, %s16
    %s19 = sphi 0, %s17
    %s20 = sphi 0, %s18
    %s32 = sphi 0, %s34
    %s35 = sphi 0, %s32
    %s36 = sphi 0, %s35
    %s52 = sphi 0, %s36
    %s60 = sphi 0, %s62
    %s63 = sphi 0, %s60
    %s64 = sphi 0, %s63
    %s80 = sphi 0, %s64
    %s86 = sphi 0, %s88
    %s89 = sphi 0, %s86
    %s90 = sphi 0, %s89
    %s106 = sphi 0, %s90
  $region4: #{gen_d_loss.1} parent=0 // loop_header_branch
    %11 = sbr.rel (%p9) target = $region8
  $region5: #{gen_d_loss.1} parent=0 // loop_body
    %s13 = ssub.s32 %s8, 1
    %s14 = ssub.s32 %s8, 2
    %s21 = sadd.s32 1, %s16
    %p22 = scmp.ge.s32.totalorder %s21, 1
    %s23 = scalar_select %p22, 0, %s21
    %s24 = sadd.s32 1, %s15
    %s25 = scalar_select %p22, %s24, %s15
    %p26 = scmp.ge.s32.totalorder %s25, 2
    %s27 = scalar_select %p26, 0, %s25
    %s28 = ssub.s32 %s15, %s27
    %s29 = ssub.s32 %s16, %s23
    %s30 = sor.u32 %s28, %s29
    %p31 = scmp.eq.s32.totalorder %s30, 0
    %s33 = sadd.s32 %s32, 1
    %s34 = scalar_select %p31, %s32, %s33
    %p37 = pneg %p31
    %p38 = scmp.eq.s32.totalorder %s8, 1
    %p39 = por %p37, %p38
    %p40 = scmp.ne.s32.totalorder %s32, %s35
    %p41 = scmp.eq.s32.totalorder %s8, 0
    %p42 = por %p40, %p41
    %p43 = scmp.ne.s32.totalorder %s32, %s35
    %p44 = scmp.eq.s32.totalorder %s13, 1
    %p45 = por %p43, %p44
    %p46 = scmp.ne.s32.totalorder %s35, %s36
    %p47 = scmp.eq.s32.totalorder %s13, 0
    %p48 = por %p46, %p47
    %p49 = scmp.ne.s32.totalorder %s35, %s36
    %p50 = scmp.eq.s32.totalorder %s14, 1
    %p51 = por %p49, %p50
    %p53 = scmp.ne.s32.totalorder %s36, %s52
    %p54 = scmp.eq.s32.totalorder %s14, 0
    %p55 = por %p53, %p54
    %s56 = ssub.s32 %s15, %s27
    %s57 = ssub.s32 %s16, %s23
    %s58 = sor.u32 %s56, %s57
    %p59 = scmp.eq.s32.totalorder %s58, 0
    %s61 = sadd.s32 %s60, 1
    %s62 = scalar_select %p59, %s60, %s61
    %p65 = pneg %p59
    %p66 = scmp.eq.s32.totalorder %s8, 1
    %p67 = por %p65, %p66
    %p68 = scmp.ne.s32.totalorder %s60, %s63
    %p69 = scmp.eq.s32.totalorder %s8, 0
    %p70 = por %p68, %p69
    %p71 = scmp.ne.s32.totalorder %s60, %s63
    %p72 = scmp.eq.s32.totalorder %s13, 1
    %p73 = por %p71, %p72
    %p74 = scmp.ne.s32.totalorder %s63, %s64
    %p75 = scmp.eq.s32.totalorder %s13, 0
    %p76 = por %p74, %p75
    %p77 = scmp.ne.s32.totalorder %s63, %s64
    %p78 = scmp.eq.s32.totalorder %s14, 1
    %p79 = por %p77, %p78
    %p81 = scmp.ne.s32.totalorder %s64, %s80
    %p82 = scmp.eq.s32.totalorder %s14, 0
    %p83 = por %p81, %p82
    %s84 = ssub.s32 %s15, %s27
    %p85 = scmp.eq.s32.totalorder %s84, 0
    %s87 = sadd.s32 %s86, 1
    %s88 = scalar_select %p85, %s86, %s87
    %p91 = pneg %p85
    %p92 = scmp.eq.s32.totalorder %s8, 1
    %p93 = por %p91, %p92
    %p94 = scmp.ne.s32.totalorder %s86, %s89
    %p95 = scmp.eq.s32.totalorder %s8, 0
    %p96 = por %p94, %p95
    %p97 = scmp.ne.s32.totalorder %s86, %s89
    %p98 = scmp.eq.s32.totalorder %s13, 1
    %p99 = por %p97, %p98
    %p100 = scmp.ne.s32.totalorder %s89, %s90
    %p101 = scmp.eq.s32.totalorder %s13, 0
    %p102 = por %p100, %p101
    %p103 = scmp.ne.s32.totalorder %s89, %s90
    %p104 = scmp.eq.s32.totalorder %s14, 1
    %p105 = por %p103, %p104
    %p107 = scmp.ne.s32.totalorder %s90, %s106
    %p108 = scmp.eq.s32.totalorder %s14, 0
    %p109 = por %p107, %p108
    %p110 = scmp.le.s32.totalorder 1, %s8
    %p111 = scmp.lt.s32.totalorder %s8, 3
    %p112 = pnand %p110, %p111
    %p113 = pneg %p112
    // Predicated region
    $region9: #{gen_d_loss.1} parent=5 // pred_check
      _
    $region10: #{gen_d_loss.1} parent=5 // pred_check_branch
      %115 = sbr.rel (%p112) target = $region12
    $region11: #{gen_d_loss.1} parent=5 // pred_region
      %s116 = ssub.s32 %s8, 1
    $region12: #{gen_d_loss.1} parent=5 // pred_fallthru
      _
    %p117 = scmp.lt.s32.totalorder %s8, 2
    // Predicated region
    $region13: #{gen_d_loss.1} parent=5 // pred_check
      %p118 = pneg %p117
    $region14: #{gen_d_loss.1} parent=5 // pred_check_branch
      %120 = sbr.rel (%p118) target = $region16
    $region15: #{gen_d_loss.1} parent=5 // pred_region
      // Predicated region
      $region17: #{gen_d_loss.1} parent=15 // pred_check
        %p121 = pneg %p42
      $region18: #{gen_d_loss.1} parent=15 // pred_check_branch
        %123 = sbr.rel (%p121) target = $region20
      $region19: #{gen_d_loss.1} parent=15 // pred_region
        %p124 = scmp.lt.s32.totalorder %s15, 1
        %s125 = scalar_select %p124, %s15, 1
        %p126 = scmp.lt.s32.totalorder %s16, 0
        %s127 = scalar_select %p126, %s16, 0
        %s128 = sadd.s32 %s127, %s125
        %s129 = smul.addr %s128, 8
        %s130 = scalar_lea.vmem %s0, %s129
      $region20: #{gen_d_loss.1} parent=15 // pred_fallthru
        _
      // Predicated region
      $region21: #{gen_d_loss.1} parent=15 // pred_check
        %p131 = pneg %p70
      $region22: #{gen_d_loss.1} parent=15 // pred_check_branch
        %133 = sbr.rel (%p131) target = $region24
      $region23: #{gen_d_loss.1} parent=15 // pred_region
        %p134 = scmp.lt.s32.totalorder %s15, 1
        %s135 = scalar_select %p134, %s15, 1
        %p136 = scmp.lt.s32.totalorder %s16, 0
        %s137 = scalar_select %p136, %s16, 0
        %s138 = sadd.s32 %s137, %s135
        %s139 = smul.addr %s138, 8
        %s140 = scalar_lea.vmem %s1, %s139
      $region24: #{gen_d_loss.1} parent=15 // pred_fallthru
        _
    $region16: #{gen_d_loss.1} parent=5 // pred_fallthru
      _
    %p141 = scmp.le.s32.totalorder 1, %s8
    %p142 = scmp.lt.s32.totalorder %s8, 3
    %p143 = pnand %p141, %p142
    %p144 = pneg %p143
    // Predicated region
    $region25: #{gen_d_loss.1} parent=5 // pred_check
      _
    $region26: #{gen_d_loss.1} parent=5 // pred_check_branch
      %146 = sbr.rel (%p143) target = $region28
    $region27: #{gen_d_loss.1} parent=5 // pred_region
      %s147 = ssub.s32 %s8, 1
      %p148 = scmp.lt.s32.totalorder %s17, 1
      %s149 = scalar_select %p148, %s17, 1
      %p150 = scmp.lt.s32.totalorder %s18, 0
      %s151 = scalar_select %p150, %s18, 0
      %s152 = sadd.s32 %s151, %s149
      %s153 = smul.addr %s152, 8
      %s154 = scalar_lea.vmem %s0, %s153
      %p155 = pneg %p48
      %p156 = pneg %p45
      %p157 = scmp.lt.s32.totalorder %s17, 1
      %s158 = scalar_select %p157, %s17, 1
      %p159 = scmp.lt.s32.totalorder %s18, 0
      %s160 = scalar_select %p159, %s18, 0
      %s161 = sadd.s32 %s160, %s158
      %s162 = smul.addr %s161, 8
      %s163 = scalar_lea.vmem %s1, %s162
      %p164 = pneg %p76
      %p165 = pneg %p73
      %p166 = pneg %p102
      %p167 = pneg %p99
      %p168 = scmp.lt.s32.totalorder %s17, 1
      %s169 = scalar_select %p168, %s17, 1
      %s170 = smul.addr %s169, 4
      %s171 = scalar_lea.vmem %s2, %s170
      %p172 = scmp.lt.s32.totalorder %s17, 1
      %s173 = scalar_select %p172, %s17, 1
      %p174 = scmp.lt.s32.totalorder %s18, 0
      %s175 = scalar_select %p174, %s18, 0
      %s176 = sadd.s32 %s175, %s173
      %s177 = smul.addr %s176, 8
      %s178 = scalar_lea.vmem %s0, %s177
      %p179 = scmp.lt.s32.totalorder %s17, 1
      %s180 = scalar_select %p179, %s17, 1
      %p181 = scmp.lt.s32.totalorder %s18, 0
      %s182 = scalar_select %p181, %s18, 0
      %s183 = sadd.s32 %s182, %s180
      %s184 = smul.addr %s183, 8
      %s185 = scalar_lea.vmem %s1, %s184
      %p186 = scmp.lt.s32.totalorder %s17, 1
      %s187 = scalar_select %p186, %s17, 1
      %s188 = smul.addr %s187, 4
      %s189 = scalar_lea.vmem %s2, %s188
      %p190 = scmp.eq.s32.totalorder %s18, 0
      // Predicated region
      $region29: #{gen_d_loss.1} parent=27 // pred_check
        %p191 = pneg %p190
      $region30: #{gen_d_loss.1} parent=27 // pred_check_branch
        %193 = sbr.rel (%p191) target = $region32
      $region31: #{gen_d_loss.1} parent=27 // pred_region
        %194 = vst [vmem:[%s189] sm:$0x7] 0.0
      $region32: #{gen_d_loss.1} parent=27 // pred_fallthru
        _
      %v195 = vld [vmem:[%s185] sm:$0xff]
      %v196 = vld [vmem:[%s178] sm:$0xff]
      %v197 = vsub.f32 0.0, %v196
      %v198 = vmul.f32 %v197, 1.442695
      %v199 = vpow.pop %v198
      %v200 = vadd.f32 %v199, 1.0
      %v201 = vrcp.pop %v200
      %v202 = vrot.slane %v195, 4
      %v203 = vadd.f32 %v195, %v202
      %v204 = vrot.slane %v203, 2
      %v205 = vadd.f32 %v203, %v204
      %v206 = vrot.slane %v205, 1
      %v207 = vadd.f32 %v205, %v206
      %v208 = vrot.slane %v201, 4
      %v209 = vadd.f32 %v201, %v208
      %v210 = vrot.slane %v209, 2
      %v211 = vadd.f32 %v209, %v210
      %v212 = vrot.slane %v211, 1
      %v213 = vadd.f32 %v211, %v212
      %v214 = vmul.f32 %v195, %v201
      %v215 = vrot.slane %v214, 4
      %v216 = vadd.f32 %v214, %v215
      %v217 = vrot.slane %v216, 2
      %v218 = vadd.f32 %v216, %v217
      %v219 = vrot.slane %v218, 1
      %v220 = vadd.f32 %v218, %v219
      %v221 = vlaneseq
      %v222 = vshrl.u32 %v221, 7
      %vm223 = vcmp.eq.s32.totalorder %v222, 0
      %v224 = vsel %vm223, %v207, 0.0
      %vm225 = vcmp.eq.s32.totalorder %v222, 1
      %v226 = vsel %vm225, %v213, 0.0
      %v227 = vadd.f32 %v224, %v226
      %vm228 = vcmp.eq.s32.totalorder %v222, 2
      %v229 = vsel %vm228, %v220, 0.0
      %v230 = vadd.f32 %v227, %v229
      %v231 = vld [vmem:[%s189] sm:$0x7]
      %v232 = vadd.f32 %v231, %v230
      %233 = vst [vmem:[%s189] sm:$0x7] %v232
      %p234 = scmp.lt.s32.totalorder %s17, 1
      %s235 = scalar_select %p234, %s17, 1
      %s236 = smul.addr %s235, 4
      %s237 = scalar_lea.vmem %s2, %s236
      // Predicated region
      $region33: #{gen_d_loss.1} parent=27 // pred_check
        %p238 = pneg %p99
      $region34: #{gen_d_loss.1} parent=27 // pred_check_branch
        %240 = sbr.rel (%p238) target = $region36
      $region35: #{gen_d_loss.1} parent=27 // pred_region
        _
      $region36: #{gen_d_loss.1} parent=27 // pred_fallthru
        _
    $region28: #{gen_d_loss.1} parent=5 // pred_fallthru
      _
    %p241 = scmp.le.s32.totalorder 2, %s8
    // Predicated region
    $region37: #{gen_d_loss.1} parent=5 // pred_check
      %p242 = pneg %p241
    $region38: #{gen_d_loss.1} parent=5 // pred_check_branch
      %244 = sbr.rel (%p242) target = $region40
    $region39: #{gen_d_loss.1} parent=5 // pred_region
      %s245 = ssub.s32 %s8, 2
      // Predicated region
      $region41: #{gen_d_loss.1} parent=39 // pred_check
        %p246 = pneg %p105
      $region42: #{gen_d_loss.1} parent=39 // pred_check_branch
        %248 = sbr.rel (%p246) target = $region44
      $region43: #{gen_d_loss.1} parent=39 // pred_region
        %p249 = scmp.lt.s32.totalorder %s19, 1
        %s250 = scalar_select %p249, %s19, 1
        %s251 = smul.addr %s250, 4
        %s252 = scalar_lea.vmem %s2, %s251
      $region44: #{gen_d_loss.1} parent=39 // pred_fallthru
        _
    $region40: #{gen_d_loss.1} parent=5 // pred_fallthru
      _
  $region6: #{gen_d_loss.1} parent=0 // loop_footer
    %s12 = sadd.s32 1, %s8
  $region7: #{gen_d_loss.1} parent=0 // loop_footer_branch
    %7 = sbr.rel target = $region3
  $region8: #{gen_d_loss.1} parent=0 // loop_exit
    _

</llo_original>
